<compile_context>
chip_gen: v6e
topology: v6e:2x2x1
jax: 0.10.0
libtpu: 0.0.40
codegen_flags: <defaults>
</compile_context>

<pallas_src>
import functools

import jax
import jax.numpy as jnp
from jax.experimental import pallas as pl
from jax.experimental.pallas import tpu as pltpu


def _layernorm_kernel(x_ref, gamma_ref, beta_ref, o_ref, *, eps, n, apply_in_f32):
    # x_ref block: (Bt, R, L); gamma/beta blocks: (R, Lg) with Lg in {1, L}.
    x = x_ref[...]                                       # native dtype
    xf = x.astype(jnp.float32)                           # one upcast per block

    # --- two-pass per-sample statistics (f32), all on the VMEM-resident block ---
    mean = jnp.sum(xf, axis=(1, 2), keepdims=True) / n   # (Bt, 1, 1)
    d = xf - mean
    # unbiased variance (torch.std default); max(n-1,1) guards the n==1 edge case.
    var = jnp.sum(d * d, axis=(1, 2), keepdims=True) / max(n - 1.0, 1.0)
    std = jnp.sqrt(var)
    # Reciprocal only touches the (Bt,1,1) per-sample vector -> off the
    # per-element path entirely; exact keeps ~ulp fidelity vs. a true divide.
    inv = pl.reciprocal(std + eps, approx=False)          # (Bt, 1, 1)

    # --- fused scale/shift (per-row or per-element, negligible vs. block) ---
    gamma = gamma_ref[...]                                # (R, Lg) f32
    beta = beta_ref[...]                                  # (R, Lg) f32
    scale = gamma[None, :, :] * inv                       # (Bt, R, Lg)

    if apply_in_f32:
        # 2 f32 VALU ops per element: y = (x - mean) * (gamma*inv) + beta.
        o_ref[...] = (d * scale + beta[None, :, :]).astype(o_ref.dtype)
    else:
        # bf16 apply (v6e/v7x): y = x*scale + shift on packed [16,128] vregs.
        shift = beta[None, :, :] - mean * scale            # (Bt, R, Lg) f32
        y = x * scale.astype(x.dtype) + shift.astype(x.dtype)
        o_ref[...] = y.astype(o_ref.dtype)


def _tpu_limits():
    """(vmem_capacity_bytes, has_bf16_vpu) with conservative fallbacks."""
    kind = ""
    try:
        kind = jax.devices()[0].device_kind.lower()
    except Exception:
        pass
    vmem_cap = None
    try:
        vmem_cap = int(pltpu.get_tpu_info().vmem_capacity_bytes)
    except Exception:
        vmem_cap = None
    if vmem_cap is None:
        vmem_cap = (64 << 20) if "v7" in kind else (128 << 20)
    has_bf16_vpu = any(t in kind for t in ("v6", "v7"))   # v5e: no bf16 VPU
    return vmem_cap, has_bf16_vpu


def _factor_sample(C, HW, min_sub):
    """Pick a lane-dense (R, L) factoring of one (C, H*W) sample.

    Returns (R, L, mode, fold) where mode is:
      "per_row"  : each row maps to one channel  -> gamma/beta are (R, 1)
      "full_map" : rows may span channels        -> gamma/beta are (R, L) maps
    """
    # Preferred: channel-aligned fold (C, HW) -> (C*f, HW//f), lanes % 128 == 0,
    # sublanes >= dtype-aware minimum.
    for f in range(1, min(HW, 256) + 1):
        if HW % f == 0 and (HW // f) % 128 == 0 and C * f >= min_sub:
            return C * f, HW // f, "per_row", f
    # Fallback: factor the whole flattened sample so lanes stay a 128 multiple
    # (avoids masked partial stores), with per-element gamma/beta maps.
    n = C * HW
    if n % 128 == 0:
        cands = [L for L in range(128, n + 1, 128) if n % L == 0]
        if cands:
            good = [L for L in cands if n // L >= min_sub]
            L = max(good) if good else max(cands)
            return n // L, L, "full_map", None
    # Last resort: per-channel rows (correct, possibly masked stores).
    return C, HW, "per_row", 1


def layer_norm(x_nchw, gamma, beta, eps=1e-5, *, max_block_f32_bytes=None):
    """x_nchw: (B, C, H, W); gamma, beta: (C,). Returns (B, C, H, W)."""
    B, C, H, W = x_nchw.shape
    HW = H * W
    n = C * HW
    itemsize = x_nchw.dtype.itemsize

    vmem_cap, has_bf16_vpu = _tpu_limits()
    # Per-step block budget (f32 bytes): smaller on v7x (64 MiB VMEM), larger on
    # v5e/v6e (128 MiB) so each grid step moves several MiB of HBM traffic.
    if max_block_f32_bytes is None:
        max_block_f32_bytes = (3 << 20) if vmem_cap <= (64 << 20) else (6 << 20)

    # Lane-/sublane-dense layout: dtype-aware minimum sublane count
    # (8 rows f32, 16 bf16, 32 int8/fp8 per packed vreg).
    min_sub = 8 * (4 // itemsize)
    R, L, mode, f = _factor_sample(C, HW, min_sub)
    x3 = x_nchw.reshape(B, R, L)

    gamma_f32 = gamma.astype(jnp.float32)
    beta_f32 = beta.astype(jnp.float32)
    if mode == "per_row":
        gamma2 = jnp.repeat(gamma_f32, f).reshape(R, 1)   # row r -> channel r//f
        beta2 = jnp.repeat(beta_f32, f).reshape(R, 1)
        Lg = 1
    else:
        gamma2 = jnp.repeat(gamma_f32, HW).reshape(R, L)  # per-element channel map
        beta2 = jnp.repeat(beta_f32, HW).reshape(R, L)
        Lg = L

    # bf16 apply path only where the VPU executes bf16 natively (v6e/v7x).
    apply_in_f32 = not (x_nchw.dtype == jnp.bfloat16 and has_bf16_vpu)

    # Samples per grid step (Bt | B), sized to the per-step budget, and capped
    # at B//2 so the grid has >= 2 steps when B >= 2 (v7x megacore sharding).
    per_sample_f32 = R * L * 4
    bt_cap = B if B < 2 else max(1, B // 2)
    Bt = 1
    for cand in range(bt_cap, 0, -1):
        if B % cand == 0 and cand * per_sample_f32 <= max_block_f32_bytes:
            Bt = cand
            break
    # TODO(synk): if a single sample exceeds the per-step budget (notably v7x's
    # 64 MiB VMEM), add a chunked-stats path: second grid axis marked
    # "arbitrary" over lane chunks with scratch sum/sumsq accumulators and a
    # second apply trip, instead of a whole-sample block.

    # Scoped-VMEM limit from the real footprint: double-buffered in/out blocks,
    # gamma/beta buffers, f32 temporaries, plus a single additive headroom.
    blk_x = Bt * R * L * itemsize
    blk_f32 = Bt * per_sample_f32
    blk_gb = 2 * R * Lg * 4                     # gamma + beta, one buffer each
    footprint = (2 * blk_x                      # input, double-buffered
                 + 2 * blk_x                    # output, double-buffered
                 + 2 * blk_gb                   # gamma/beta, double-buffered
                 + (2 if apply_in_f32 else 1) * blk_f32)   # f32 temporaries
    scoped_cap = min(int(vmem_cap * 0.6), 96 << 20)   # ~38 MiB v7x, ~77 MiB v5e/v6e
    vmem_limit = int(min(max(footprint + (4 << 20), 16 << 20), scoped_cap))

    kernel = functools.partial(_layernorm_kernel, eps=float(eps), n=float(n),
                               apply_in_f32=apply_in_f32)

    out = pl.pallas_call(
        kernel,
        out_shape=jax.ShapeDtypeStruct((B, R, L), x_nchw.dtype),
        grid_spec=pltpu.PrefetchScalarGridSpec(
            num_scalar_prefetch=0,
            grid=(B // Bt,),
            in_specs=[
                pl.BlockSpec((Bt, R, L), lambda b: (b, 0, 0)),
                pl.BlockSpec((R, Lg), lambda b: (0, 0)),
                pl.BlockSpec((R, Lg), lambda b: (0, 0)),
            ],
            out_specs=pl.BlockSpec((Bt, R, L), lambda b: (b, 0, 0)),
        ),
        compiler_params=pltpu.CompilerParams(
            dimension_semantics=("parallel",),   # batch axis shards across TCs
            vmem_limit_bytes=vmem_limit,
        ),
    )(x3, gamma2, beta2)

    return out.reshape(B, C, H, W)


if __name__ == "__main__":
    key = jax.random.PRNGKey(0)
    kx, kg = jax.random.split(key)

    B, C, H, W = 2, 4, 16, 16
    x = jax.random.normal(kx, (B, C, H, W), dtype=jnp.float32)

    # Deterministic parameter init (module __init__: gamma ~ U[0,1), beta = 0).
    gamma = jax.random.uniform(kg, (C,), dtype=jnp.float32)
    beta = jnp.zeros((C,), dtype=jnp.float32)

    y = layer_norm(x, gamma, beta, eps=1e-5)
    y = jax.block_until_ready(y)

    # Pure-JAX reference (same math as the PyTorch module, two-pass stats).
    xf = x.reshape(B, -1)
    mean = xf.mean(axis=1).reshape(B, 1, 1, 1)
    var = ((xf - xf.mean(axis=1, keepdims=True)) ** 2).sum(axis=1) / (xf.shape[1] - 1)
    std = jnp.sqrt(var).reshape(B, 1, 1, 1)
    y_ref = (x - mean) / (std + 1e-5)
    y_ref = gamma.reshape(1, C, 1, 1) * y_ref + beta.reshape(1, C, 1, 1)

    assert jnp.allclose(y, y_ref, atol=1e-4, rtol=1e-4), "mismatch vs reference"

    print("KERNEL_OK")
</pallas_src>

<mosaic_0001>
module attributes {stable_mosaic.version = 11 : i64} {
  func.func @_layernorm_kernel(%arg0: i32, %arg1: memref<1x8x128xf32, #tpu.memory_space<vmem>>, %arg2: memref<8x1xf32, #tpu.memory_space<vmem>>, %arg3: memref<8x1xf32, #tpu.memory_space<vmem>>, %arg4: memref<1x8x128xf32, #tpu.memory_space<vmem>>) attributes {dimension_semantics = [#tpu.dimension_semantics<parallel>], iteration_bounds = array<i64: 2>, scalar_prefetch = 0 : i64, scratch_operands = 0 : i64, tpu.core_type = #tpu.core_type<tc>, window_params = [{transform_indices = @transform_0, window_bounds = array<i64: 1, 8, 128>}, {pipeline_mode = #tpu.pipeline_mode<synchronous>, transform_indices = @transform_1, window_bounds = array<i64: 8, 1>}, {pipeline_mode = #tpu.pipeline_mode<synchronous>, transform_indices = @transform_2, window_bounds = array<i64: 8, 1>}, {transform_indices = @transform_3, window_bounds = array<i64: 1, 8, 128>}]} {
    %c0 = arith.constant 0 : index
    %c0_0 = arith.constant 0 : index
    %c0_1 = arith.constant 0 : index
    %0 = vector.load %arg1[%c0, %c0_0, %c0_1] : memref<1x8x128xf32, #tpu.memory_space<vmem>>, vector<1x8x128xf32>
    %cst = arith.constant dense<0.000000e+00> : vector<1xf32>
    %1 = vector.multi_reduction <add>, %0, %cst [1, 2] : vector<1x8x128xf32> to vector<1xf32>
    %2 = vector.shape_cast %1 : vector<1xf32> to vector<1x1x1xf32>
    %cst_2 = arith.constant 1.024000e+03 : f32
    %3 = vector.broadcast %cst_2 : f32 to vector<1x1x1xf32>
    %4 = arith.divf %2, %3 : vector<1x1x1xf32>
    %5 = vector.broadcast %4 : vector<1x1x1xf32> to vector<1x8x128xf32>
    %6 = arith.subf %0, %5 : vector<1x8x128xf32>
    %7 = arith.mulf %6, %6 : vector<1x8x128xf32>
    %cst_3 = arith.constant dense<0.000000e+00> : vector<1xf32>
    %8 = vector.multi_reduction <add>, %7, %cst_3 [1, 2] : vector<1x8x128xf32> to vector<1xf32>
    %9 = vector.shape_cast %8 : vector<1xf32> to vector<1x1x1xf32>
    %cst_4 = arith.constant 1.023000e+03 : f32
    %10 = vector.broadcast %cst_4 : f32 to vector<1x1x1xf32>
    %11 = arith.divf %9, %10 : vector<1x1x1xf32>
    %12 = math.sqrt %11 : vector<1x1x1xf32>
    %cst_5 = arith.constant 9.99999974E-6 : f32
    %13 = vector.broadcast %cst_5 : f32 to vector<1x1x1xf32>
    %14 = arith.addf %12, %13 : vector<1x1x1xf32>
    %15 = tpu.reciprocal %14 : vector<1x1x1xf32> -> vector<1x1x1xf32>
    %c0_6 = arith.constant 0 : index
    %c0_7 = arith.constant 0 : index
    %16 = vector.load %arg2[%c0_6, %c0_7] : memref<8x1xf32, #tpu.memory_space<vmem>>, vector<8x1xf32>
    %c0_8 = arith.constant 0 : index
    %c0_9 = arith.constant 0 : index
    %17 = vector.load %arg3[%c0_8, %c0_9] : memref<8x1xf32, #tpu.memory_space<vmem>>, vector<8x1xf32>
    %18 = vector.shape_cast %16 : vector<8x1xf32> to vector<1x8x1xf32>
    %19 = vector.broadcast %15 : vector<1x1x1xf32> to vector<1x8x1xf32>
    %20 = arith.mulf %18, %19 : vector<1x8x1xf32>
    %21 = vector.broadcast %20 : vector<1x8x1xf32> to vector<1x8x128xf32>
    %22 = arith.mulf %6, %21 : vector<1x8x128xf32>
    %23 = vector.shape_cast %17 : vector<8x1xf32> to vector<1x8x1xf32>
    %24 = vector.broadcast %23 : vector<1x8x1xf32> to vector<1x8x128xf32>
    %25 = arith.addf %22, %24 : vector<1x8x128xf32>
    %c0_10 = arith.constant 0 : index
    %c0_11 = arith.constant 0 : index
    %c0_12 = arith.constant 0 : index
    %26 = vector.load %arg4[%c0_10, %c0_11, %c0_12] : memref<1x8x128xf32, #tpu.memory_space<vmem>>, vector<1x8x128xf32>
    tpu.vector_store %arg4[%c0_10, %c0_11, %c0_12], %25 {strides = array<i32>} : memref<1x8x128xf32, #tpu.memory_space<vmem>>, vector<1x8x128xf32>,
    return
  }
  func.func @transform_0(%arg0: i32) -> (i32, i32, i32) {
    %c0_i32 = arith.constant 0 : i32
    %c0_i32_0 = arith.constant 0 : i32
    %c0_i32_1 = arith.constant 0 : i32
    return %arg0, %c0_i32, %c0_i32_0 : i32, i32, i32
  }
  func.func @transform_1(%arg0: i32) -> (i32, i32) {
    %c0_i32 = arith.constant 0 : i32
    %c0_i32_0 = arith.constant 0 : i32
    %c0_i32_1 = arith.constant 0 : i32
    return %c0_i32, %c0_i32_0 : i32, i32
  }
  func.func @transform_2(%arg0: i32) -> (i32, i32) {
    %c0_i32 = arith.constant 0 : i32
    %c0_i32_0 = arith.constant 0 : i32
    %c0_i32_1 = arith.constant 0 : i32
    return %c0_i32, %c0_i32_0 : i32, i32
  }
  func.func @transform_3(%arg0: i32) -> (i32, i32, i32) {
    %c0_i32 = arith.constant 0 : i32
    %c0_i32_0 = arith.constant 0 : i32
    %c0_i32_1 = arith.constant 0 : i32
    return %arg0, %c0_i32, %c0_i32_0 : i32, i32, i32
  }
}

</mosaic_0001>

<llo_original>
// kernel: tpu_custom_call.1
$region0: #{tpu_custom_call.1}
  #allocation0 [shape = 'u32[]', space=smem, size = 0x4, offset = 0x4, fixed_abs, tag = 'smem constant byte address 0x4 - core index']
  #allocation1 [shape = 'u32[144,128]{1,0:T(1,128)}', space=vmem, size = 0x12000, scoped, tag = 'internal scratch']
  %s0 = inlined_call_operand.vmem [shape: f32[2,8,128], index: 0, kind: input, shape index: {}]
  %s1 = inlined_call_operand.vmem [shape: f32[8,1], index: 1, kind: input, shape index: {}]
  %s2 = inlined_call_operand.vmem [shape: f32[8,1], index: 2, kind: input, shape index: {}]
  %s3 = inlined_call_operand.hbm [shape: f32[2,8,128], index: 3, kind: output, shape index: {}]
  %s4 = sld [smem:[#allocation0]]
  $region45: #{tpu_custom_call.1} parent=0
    _
  %s6 = ssub.s32 1, %s4
  %s7 = scalar_select 0, %s6, %s4
  $region1: #{tpu_custom_call.1} parent=0
    #allocation2 [shape = 'u8[8192]{0}', space=vmem, size = 0x2000, scoped, tag = 'output window, operand 0']
    #allocation3 [shape = 's32[2]{0}', space=sflag, size = 0x8, scoped, tag = 'scoped memory for tpu_custom_call.1']
    %8 = vsyncpa [#allocation3], 0
    %s9 = scalar_lea.sflag [#allocation3], 1
    %10 = vsyncpa %s9, 0
    loop: start=0, step=1, limit=4
    $region2: #{tpu_custom_call.1} parent=1 // loop_pre_header
      _
    $region3: #{tpu_custom_call.1} parent=1 // loop_header
      %s12 = sphi 0, %s16
      %p13 = scmp.ge.s32.totalorder %s12, 4
      %s22 = sphi 0, %s24
      %s25 = sphi 0, %s22
      %s26 = sphi 0, %s25
      %s42 = sphi 0, %s26
      %s46 = sphi 0, %s46
      %s48 = sphi 0, %s46
      %s49 = sphi 0, %s48
      %s63 = sphi 0, %s49
      %s67 = sphi 0, %s67
      %s69 = sphi 0, %s67
      %s70 = sphi 0, %s69
      %s84 = sphi 0, %s70
      %s90 = sphi 0, %s92
      %s93 = sphi 0, %s90
      %s94 = sphi 0, %s93
      %s110 = sphi 0, %s94
    $region4: #{tpu_custom_call.1} parent=1 // loop_header_branch
      %15 = sbr.rel (%p13) target = $region8
    $region5: #{tpu_custom_call.1} parent=1 // loop_body
      %s17 = ssub.s32 %s12, 1
      %s18 = ssub.s32 %s12, 2
      %s19 = sadd.s32 %s12, 1
      %s20 = ssub.s32 %s12, %s19
      %p21 = scmp.eq.s32.totalorder %s20, 0
      %s23 = sadd.s32 %s22, 1
      %s24 = scalar_select %p21, %s22, %s23
      %p27 = pneg %p21
      %p28 = scmp.eq.s32.totalorder %s12, 1
      %p29 = por %p27, %p28
      %p30 = scmp.ne.s32.totalorder %s22, %s25
      %p31 = scmp.eq.s32.totalorder %s12, 0
      %p32 = por %p30, %p31
      %p33 = scmp.ne.s32.totalorder %s22, %s25
      %p34 = scmp.eq.s32.totalorder %s17, 1
      %p35 = por %p33, %p34
      %p36 = scmp.ne.s32.totalorder %s25, %s26
      %p37 = scmp.eq.s32.totalorder %s17, 0
      %p38 = por %p36, %p37
      %p39 = scmp.ne.s32.totalorder %s25, %s26
      %p40 = scmp.eq.s32.totalorder %s18, 1
      %p41 = por %p39, %p40
      %p43 = scmp.ne.s32.totalorder %s26, %s42
      %p44 = scmp.eq.s32.totalorder %s18, 0
      %p45 = por %p43, %p44
      %s47 = sadd.s32 %s46, 1
      %p50 = scmp.eq.s32.totalorder %s12, 1
      %p51 = scmp.ne.s32.totalorder %s46, %s48
      %p52 = scmp.eq.s32.totalorder %s12, 0
      %p53 = por %p51, %p52
      %p54 = scmp.ne.s32.totalorder %s46, %s48
      %p55 = scmp.eq.s32.totalorder %s17, 1
      %p56 = por %p54, %p55
      %p57 = scmp.ne.s32.totalorder %s48, %s49
      %p58 = scmp.eq.s32.totalorder %s17, 0
      %p59 = por %p57, %p58
      %p60 = scmp.ne.s32.totalorder %s48, %s49
      %p61 = scmp.eq.s32.totalorder %s18, 1
      %p62 = por %p60, %p61
      %p64 = scmp.ne.s32.totalorder %s49, %s63
      %p65 = scmp.eq.s32.totalorder %s18, 0
      %p66 = por %p64, %p65
      %s68 = sadd.s32 %s67, 1
      %p71 = scmp.eq.s32.totalorder %s12, 1
      %p72 = scmp.ne.s32.totalorder %s67, %s69
      %p73 = scmp.eq.s32.totalorder %s12, 0
      %p74 = por %p72, %p73
      %p75 = scmp.ne.s32.totalorder %s67, %s69
      %p76 = scmp.eq.s32.totalorder %s17, 1
      %p77 = por %p75, %p76
      %p78 = scmp.ne.s32.totalorder %s69, %s70
      %p79 = scmp.eq.s32.totalorder %s17, 0
      %p80 = por %p78, %p79
      %p81 = scmp.ne.s32.totalorder %s69, %s70
      %p82 = scmp.eq.s32.totalorder %s18, 1
      %p83 = por %p81, %p82
      %p85 = scmp.ne.s32.totalorder %s70, %s84
      %p86 = scmp.eq.s32.totalorder %s18, 0
      %p87 = por %p85, %p86
      %s88 = ssub.s32 %s12, %s19
      %p89 = scmp.eq.s32.totalorder %s88, 0
      %s91 = sadd.s32 %s90, 1
      %s92 = scalar_select %p89, %s90, %s91
      %p95 = pneg %p89
      %p96 = scmp.eq.s32.totalorder %s12, 1
      %p97 = por %p95, %p96
      %p98 = scmp.ne.s32.totalorder %s90, %s93
      %p99 = scmp.eq.s32.totalorder %s12, 0
      %p100 = por %p98, %p99
      %p101 = scmp.ne.s32.totalorder %s90, %s93
      %p102 = scmp.eq.s32.totalorder %s17, 1
      %p103 = por %p101, %p102
      %p104 = scmp.ne.s32.totalorder %s93, %s94
      %p105 = scmp.eq.s32.totalorder %s17, 0
      %p106 = por %p104, %p105
      %p107 = scmp.ne.s32.totalorder %s93, %s94
      %p108 = scmp.eq.s32.totalorder %s18, 1
      %p109 = por %p107, %p108
      %p111 = scmp.ne.s32.totalorder %s94, %s110
      %p112 = scmp.eq.s32.totalorder %s18, 0
      %p113 = por %p111, %p112
      %p114 = scmp.le.s32.totalorder 1, %s12
      %p115 = scmp.lt.s32.totalorder %s12, 3
      %p116 = pnand %p114, %p115
      %p117 = pneg %p116
      // Predicated region
      $region9: #{tpu_custom_call.1} parent=5 // pred_check
        _
      $region10: #{tpu_custom_call.1} parent=5 // pred_check_branch
        %119 = sbr.rel (%p116) target = $region12
      $region11: #{tpu_custom_call.1} parent=5 // pred_region
        %s120 = ssub.s32 %s12, 1
        // Predicated region
        $region13: #{tpu_custom_call.1} parent=11 // pred_check
          %p121 = pneg %p59
        $region14: #{tpu_custom_call.1} parent=11 // pred_check_branch
          %123 = sbr.rel (%p121) target = $region16
        $region15: #{tpu_custom_call.1} parent=11 // pred_region
          _
        $region16: #{tpu_custom_call.1} parent=11 // pred_fallthru
          _
        // Predicated region
        $region17: #{tpu_custom_call.1} parent=11 // pred_check
          %p124 = pneg %p80
        $region18: #{tpu_custom_call.1} parent=11 // pred_check_branch
          %126 = sbr.rel (%p124) target = $region20
        $region19: #{tpu_custom_call.1} parent=11 // pred_region
          _
        $region20: #{tpu_custom_call.1} parent=11 // pred_fallthru
          _
      $region12: #{tpu_custom_call.1} parent=5 // pred_fallthru
        _
      %p127 = scmp.lt.s32.totalorder %s12, 2
      // Predicated region
      $region21: #{tpu_custom_call.1} parent=5 // pred_check
        %p128 = pneg %p127
      $region22: #{tpu_custom_call.1} parent=5 // pred_check_branch
        %130 = sbr.rel (%p128) target = $region24
      $region23: #{tpu_custom_call.1} parent=5 // pred_region
        // Predicated region
        $region25: #{tpu_custom_call.1} parent=23 // pred_check
          %p131 = pneg %p32
        $region26: #{tpu_custom_call.1} parent=23 // pred_check_branch
          %133 = sbr.rel (%p131) target = $region28
        $region27: #{tpu_custom_call.1} parent=23 // pred_region
          %p134 = scmp.lt.s32.totalorder %s12, 1
          %s135 = scalar_select %p134, %s12, 1
          %s136 = smul.addr %s135, 8
          %s137 = scalar_lea.vmem %s0, %s136
        $region28: #{tpu_custom_call.1} parent=23 // pred_fallthru
          _
      $region24: #{tpu_custom_call.1} parent=5 // pred_fallthru
        _
      %p138 = scmp.le.s32.totalorder 1, %s12
      %p139 = scmp.lt.s32.totalorder %s12, 3
      %p140 = pnand %p138, %p139
      %p141 = pneg %p140
      // Predicated region
      $region29: #{tpu_custom_call.1} parent=5 // pred_check
        _
      $region30: #{tpu_custom_call.1} parent=5 // pred_check_branch
        %143 = sbr.rel (%p140) target = $region32
      $region31: #{tpu_custom_call.1} parent=5 // pred_region
        %s144 = ssub.s32 %s12, 1
        %p145 = scmp.lt.s32.totalorder %s17, 1
        %s146 = scalar_select %p145, %s17, 1
        %s147 = smul.addr %s146, 8
        %s148 = scalar_lea.vmem %s0, %s147
        %p149 = pneg %p38
        %p150 = pneg %p35
        %p151 = pneg %p59
        %p152 = pneg %p56
        %p153 = pneg %p80
        %p154 = pneg %p77
        %p155 = pneg %p106
        %p156 = pneg %p103
        %s157 = sand.u32 %s93, 1
        %s158 = scalar_lea.sflag [#allocation3], %s157
        %s159 = sand.u32 %s93, 1
        %s160 = smul.addr %s159, 8
        %s161 = scalar_lea.vmem [#allocation2], %s160
        %p162 = scmp.lt.s32.totalorder %s17, 1
        %s163 = scalar_select %p162, %s17, 1
        %s164 = smul.addr %s163, 8
        %s165 = scalar_lea.vmem %s0, %s164
        %v166 = vld [vmem:[%s165] sm:$0xff]
        %167 = vadd.xlane.f32.xlu0 %v166
        %v168 = vpop.xlane.xlu0 %167
        %v169 = vrot.slane %v168, 4
        %v170 = vadd.f32 %v168, %v169
        %v171 = vrot.slane %v170, 2
        %v172 = vadd.f32 %v170, %v171
        %v173 = vrot.slane %v172, 1
        %v174 = vadd.f32 %v172, %v173
        %v175 = vrcp.pop 1024.0
        %v176 = vmul.f32 %v174, %v175
        %v177 = vsub.f32 %v166, %v176
        %v178 = vmul.f32 %v177, %v177
        %179 = vadd.xlane.f32.xlu0 %v178
        %v180 = vpop.xlane.xlu0 %179
        %v181 = vrot.slane %v180, 4
        %v182 = vadd.f32 %v180, %v181
        %v183 = vrot.slane %v182, 2
        %v184 = vadd.f32 %v182, %v183
        %v185 = vrot.slane %v184, 1
        %v186 = vadd.f32 %v184, %v185
        %v187 = vrcp.pop 1023.0
        %v188 = vmul.f32 %v186, %v187
        %v189 = vrsqrt.pop %v188
        %v190 = vmul.f32 %v188, %v189
        %vm191 = vcmp.eq.f32.partialorder %v188, inf
        %v192 = vsel %vm191, %v188, %v190
        %vm193 = vcmp.eq.f32.partialorder %v188, 0.0
        %v194 = vand.u32 %v188, 2147483648
        %v195 = vsel %vm193, %v194, %v192
        %v196 = vadd.f32 %v195, 1e-05
        %v197 = vrcp.pop %v196
        %v198 = vld [vmem:[%s1] sm:$0xff]
        %v199 = vld [vmem:[%s2] sm:$0xff]
        %v200 = vmul.f32 %v198, %v197
        %202 = vset.pattern.permute.xlu0 0
        %203 = vperm.xlu0 %202, %v200
        %v204 = vpop.permute.xlu0 %203
        %v206 = vmul.f32 %v177, %v204
        %208 = vset.pattern.permute.xlu0 0
        %209 = vperm.xlu0 %208, %v199
        %v210 = vpop.permute.xlu0 %209
        %v212 = vadd.f32 %v206, %v210
        %213 = vst [vmem:[%s161] sm:$0xff] %v212
        %s214 = sand.u32 %s93, 1
        %s215 = scalar_lea.sflag [#allocation3], %s214
        %s216 = sand.u32 %s93, 1
        %s217 = smul.addr %s216, 8
        %s218 = scalar_lea.vmem [#allocation2], %s217
        // Predicated region
        $region33: #{tpu_custom_call.1} parent=31 // pred_check
          %p219 = pneg %p103
        $region34: #{tpu_custom_call.1} parent=31 // pred_check_branch
          %221 = sbr.rel (%p219) target = $region36
        $region35: #{tpu_custom_call.1} parent=31 // pred_region
          %s223 = ssub.s32 128, 128
          %224 = vsyncadd %s215, %s223
          %s225 = smul.addr %s17, 128
          %s226 = scalar_lea.hbm %s3, %s225
          %s228 = sshll.u32 %s218, 4
          %s229 = int_to_ptr.vmem [resolvable:$true] %s228
          %231 = dma.vmem_to_hbm [thread:$0]  %s229, 128, %s226, %s215
        $region36: #{tpu_custom_call.1} parent=31 // pred_fallthru
          _
      $region32: #{tpu_custom_call.1} parent=5 // pred_fallthru
        _
      %p232 = scmp.le.s32.totalorder 2, %s12
      // Predicated region
      $region37: #{tpu_custom_call.1} parent=5 // pred_check
        %p233 = pneg %p232
      $region38: #{tpu_custom_call.1} parent=5 // pred_check_branch
        %235 = sbr.rel (%p233) target = $region40
      $region39: #{tpu_custom_call.1} parent=5 // pred_region
        %s236 = ssub.s32 %s12, 2
        // Predicated region
        $region41: #{tpu_custom_call.1} parent=39 // pred_check
          %p237 = pneg %p109
        $region42: #{tpu_custom_call.1} parent=39 // pred_check_branch
          %239 = sbr.rel (%p237) target = $region44
        $region43: #{tpu_custom_call.1} parent=39 // pred_region
          %s240 = sand.u32 %s94, 1
          %s241 = scalar_lea.sflag [#allocation3], %s240
          %s242 = sand.u32 %s94, 1
          %s243 = smul.addr %s242, 8
          %s244 = scalar_lea.vmem [#allocation2], %s243
          %245 = dma.done %s241, 128
        $region44: #{tpu_custom_call.1} parent=39 // pred_fallthru
          _
      $region40: #{tpu_custom_call.1} parent=5 // pred_fallthru
        _
    $region6: #{tpu_custom_call.1} parent=1 // loop_footer
      %s16 = sadd.s32 1, %s12
    $region7: #{tpu_custom_call.1} parent=1 // loop_footer_branch
      %11 = sbr.rel target = $region3
    $region8: #{tpu_custom_call.1} parent=1 // loop_exit
      _
    %246 = vsyncpa [#allocation3], 1
    %s247 = scalar_lea.sflag [#allocation3], 1
    %248 = vsyncpa %s247, 1

</llo_original>
